<compile_context>
chip_gen: v5e
topology: v5e:2x2
jax: 0.10.0
libtpu: 0.0.40
codegen_flags: <defaults>
</compile_context>

<pallas_src>
import jax
import jax.numpy as jnp
from jax.experimental import pallas as pl
from jax.experimental.pallas import tpu as pltpu


def _attn_pool_kernel(seq_ref, mask_ref, w_ref, b_ref, pooled_ref, attn_ref):
    # seq_ref:    (NB, S, H)  native dtype (VMEM)
    # mask_ref:   (NB, 1, S)  float32      (VMEM)  0.0 => masked out
    # w_ref:      (1, 1, H)   native dtype (VMEM)
    # b_ref:      (1, 1)      float32      (SMEM)
    # pooled_ref: (NB, 1, H)  out, native dtype
    # attn_ref:   (NB, 1, S)  out, attn dtype
    nb, s, h = seq_ref.shape
    seq = seq_ref[...]                                    # (NB, S, H), native dtype
    w3 = jnp.broadcast_to(w_ref[...], (nb, 1, h))         # (NB, 1, H)
    bias = b_ref[0, 0]                                    # scalar from SMEM

    # ---- Score projection straight onto a lane-dense row on the MXU:
    #      (NB,1,H) x (NB,S,H)^T -> (NB,1,S), f32 accumulation.
    scores_row = jnp.einsum("nkd,nsd->nks", w3, seq,
                            preferred_element_type=jnp.float32)       # (NB, 1, S)
    scores_row = scores_row + bias

    # ---- masked_fill(attention_mask == 0, -1e9) + softmax over the sequence axis.
    scores_row = jnp.where(mask_ref[...] == 0.0,
                           jnp.float32(-1000000000.0), scores_row)
    m = jnp.max(scores_row, axis=-1, keepdims=True)                   # (NB, 1, 1)
    e = jnp.exp(scores_row - m)                                       # (NB, 1, S)
    denom = jnp.sum(e, axis=-1, keepdims=True)                        # (NB, 1, 1)
    inv = pl.reciprocal(denom, approx=False)                          # EUP, exact
    weights = e * inv                                                 # (NB, 1, S)
    attn_ref[...] = weights.astype(attn_ref.dtype)                    # lane-dense store

    # ---- Weighted pooling on the MXU: (NB,1,S) x (NB,S,H) -> (NB,1,H), f32 acc.
    pooled = jnp.einsum("nks,nsh->nkh", weights.astype(seq.dtype), seq,
                        preferred_element_type=jnp.float32)
    pooled_ref[...] = pooled.astype(pooled_ref.dtype)


def _physical_vmem_bytes():
    try:
        return int(pltpu.get_tpu_info().vmem_capacity_bytes)
    except Exception:
        return 64 * 1024 * 1024          # conservative (v7x per-TC VMEM)


def _pick_block_b(B, S, H, seq_itemsize, attn_itemsize, budget_bytes):
    """Largest divisor of B whose double-buffered tiles fit the VMEM budget,
    capped at B // 2 so the batch grid keeps >= 2 steps (v7x dual-TC)."""
    per_row = 2 * (S * H * seq_itemsize        # sequence tile
                   + S * 4                     # mask row (f32)
                   + S * attn_itemsize         # attention-weight output row
                   + H * seq_itemsize)         # pooled output row
    fixed = 2 * H * seq_itemsize               # replicated weight tile
    cap = max(1, (budget_bytes - fixed) // per_row)
    if B >= 2:
        cap = min(cap, B // 2)
    cap = min(cap, B)
    nb = 1
    for d in range(1, int(cap) + 1):
        if B % d == 0:
            nb = d
    tile_bytes = fixed + nb * per_row
    return nb, tile_bytes


def bert_attention_pool(sequence_output, attention_mask, weight, bias,
                        *, block_b=None, attn_dtype=jnp.float32):
    """Pallas implementation of BERTAttentionPool.forward.

    Args:
      sequence_output: [B, S, H] float array.
      attention_mask:  [B, S] array (0 = padding) or None.
      weight:          [1, H] nn.Linear(hidden, 1) weight.
      bias:            [1]    nn.Linear bias.
      attn_dtype:      dtype of the returned attention weights (f32 default;
                       pass bf16 to halve that HBM write if tolerable).

    Returns:
      pooled_output:     [B, H]        (sequence_output dtype)
      attention_weights: [B, S]        (attn_dtype)
    """
    B, S, H = sequence_output.shape
    dtype = sequence_output.dtype
    seq_itemsize = jnp.dtype(dtype).itemsize
    attn_itemsize = jnp.dtype(attn_dtype).itemsize

    if attention_mask is None:
        mask_row = jnp.ones((B, 1, S), dtype=jnp.float32)
    else:
        mask_row = attention_mask.astype(jnp.float32).reshape(B, 1, S)

    w3 = weight.reshape(1, 1, H).astype(dtype)
    b2 = bias.reshape(1, 1).astype(jnp.float32)

    physical_vmem = _physical_vmem_bytes()
    budget = physical_vmem // 2            # leave headroom for compiler scratch
    if block_b is None:
        nb, tile_bytes = _pick_block_b(B, S, H, seq_itemsize, attn_itemsize, budget)
    else:
        nb = block_b
        _, tile_bytes = _pick_block_b(B, S, H, seq_itemsize, attn_itemsize, budget)
        tile_bytes = max(tile_bytes, 2 * nb * S * H * seq_itemsize)

    # Scoped-VMEM limit sized to the chosen tiles (defaults are only 16/32 MiB
    # on v5e/v6e even though physical VMEM is 128 MiB); never ask for more than
    # 3/4 of physical (v7x has only 64 MiB).
    vmem_limit = int(min(max(tile_bytes * 5 // 4, 32 * 1024 * 1024),
                         physical_vmem * 3 // 4))

    pooled3, attn3 = pl.pallas_call(
        _attn_pool_kernel,
        out_shape=(
            jax.ShapeDtypeStruct((B, 1, H), dtype),
            jax.ShapeDtypeStruct((B, 1, S), attn_dtype),
        ),
        grid_spec=pltpu.PrefetchScalarGridSpec(
            num_scalar_prefetch=0,
            grid=(B // nb,),
            in_specs=[
                pl.BlockSpec((nb, S, H), lambda b: (b, 0, 0)),   # sequence tile
                pl.BlockSpec((nb, 1, S), lambda b: (b, 0, 0)),   # mask (lane-dense)
                pl.BlockSpec((1, 1, H), lambda b: (0, 0, 0)),    # weight (replicated)
                pl.BlockSpec(memory_space=pltpu.MemorySpace.SMEM),  # bias scalar
            ],
            out_specs=[
                pl.BlockSpec((nb, 1, H), lambda b: (b, 0, 0)),   # pooled
                pl.BlockSpec((nb, 1, S), lambda b: (b, 0, 0)),   # attention weights
            ],
        ),
        compiler_params=pltpu.CompilerParams(
            dimension_semantics=("parallel",),
            vmem_limit_bytes=vmem_limit),
    )(sequence_output, mask_row, w3, b2)

    # Metadata-only reshapes in the wrapper (contiguous trailing dims).
    return pooled3.reshape(B, H), attn3.reshape(B, S)


def _reference(sequence_output, attention_mask, weight, bias):
    """Pure-JAX reference mirroring the PyTorch forward."""
    scores = jnp.einsum("bsh,oh->bso", sequence_output, weight)[..., 0] + bias[0]
    if attention_mask is not None:
        scores = jnp.where(attention_mask == 0, -1000000000.0, scores)
    wts = jax.nn.softmax(scores, axis=-1)
    pooled = jnp.einsum("bs,bsh->bh", wts, sequence_output)
    return pooled, wts


if __name__ == "__main__":
    key = jax.random.PRNGKey(0)
    B, S, H = 2, 8, 32

    k_seq, k_w, k_b = jax.random.split(key, 3)
    sequence_output = jax.random.normal(k_seq, (B, S, H), dtype=jnp.float32)

    # nn.Linear(hidden_size, 1)-style init: U(-1/sqrt(H), 1/sqrt(H))
    bound = 1.0 / (H ** 0.5)
    weight = jax.random.uniform(k_w, (1, H), minval=-bound, maxval=bound,
                                dtype=jnp.float32)
    bias = jax.random.uniform(k_b, (1,), minval=-bound, maxval=bound,
                              dtype=jnp.float32)

    # Attention mask with some padding (last two positions of batch 1 masked out).
    attention_mask = jnp.ones((B, S), dtype=jnp.int32)
    attention_mask = attention_mask.at[1, -2:].set(0)

    # Masked case.
    pooled, attn = bert_attention_pool(sequence_output, attention_mask, weight, bias)
    pooled = jax.block_until_ready(pooled)
    attn = jax.block_until_ready(attn)
    pooled_ref, attn_ref = _reference(sequence_output, attention_mask, weight, bias)
    assert jnp.allclose(pooled, pooled_ref, atol=1e-5, rtol=1e-5)
    assert jnp.allclose(attn, attn_ref, atol=1e-5, rtol=1e-5)
    assert jnp.allclose(jnp.sum(attn, axis=-1), 1.0, atol=1e-5)

    # No-mask case (attention_mask=None path).
    pooled_n, attn_n = bert_attention_pool(sequence_output, None, weight, bias)
    pooled_n = jax.block_until_ready(pooled_n)
    attn_n = jax.block_until_ready(attn_n)
    pooled_nr, attn_nr = _reference(sequence_output, None, weight, bias)
    assert jnp.allclose(pooled_n, pooled_nr, atol=1e-5, rtol=1e-5)
    assert jnp.allclose(attn_n, attn_nr, atol=1e-5, rtol=1e-5)

    print("KERNEL_OK")
</pallas_src>

<mosaic_0001>
module attributes {stable_mosaic.version = 11 : i64} {
  func.func @_attn_pool_kernel(%arg0: i32, %arg1: memref<1x8x32xf32, #tpu.memory_space<vmem>>, %arg2: memref<1x1x8xf32, #tpu.memory_space<vmem>>, %arg3: memref<1x1x32xf32, #tpu.memory_space<vmem>>, %arg4: memref<1x1xf32, #tpu.memory_space<smem>>, %arg5: memref<1x1x32xf32, #tpu.memory_space<vmem>>, %arg6: memref<1x1x8xf32, #tpu.memory_space<vmem>>) attributes {dimension_semantics = [#tpu.dimension_semantics<parallel>], iteration_bounds = array<i64: 2>, scalar_prefetch = 0 : i64, scratch_operands = 0 : i64, tpu.core_type = #tpu.core_type<tc>, window_params = [{transform_indices = @transform_0, window_bounds = array<i64: 1, 8, 32>}, {transform_indices = @transform_1, window_bounds = array<i64: 1, 1, 8>}, {pipeline_mode = #tpu.pipeline_mode<synchronous>, transform_indices = @transform_2, window_bounds = array<i64: 1, 1, 32>}, {transform_indices = @transform_3, window_bounds = array<i64: 1, 1>}, {transform_indices = @transform_4, window_bounds = array<i64: 1, 1, 32>}, {transform_indices = @transform_5, window_bounds = array<i64: 1, 1, 8>}]} {
    %c0 = arith.constant 0 : index
    %c0_0 = arith.constant 0 : index
    %c0_1 = arith.constant 0 : index
    %0 = vector.load %arg1[%c0, %c0_0, %c0_1] : memref<1x8x32xf32, #tpu.memory_space<vmem>>, vector<1x8x32xf32>
    %c0_2 = arith.constant 0 : index
    %c0_3 = arith.constant 0 : index
    %c0_4 = arith.constant 0 : index
    %1 = vector.load %arg3[%c0_2, %c0_3, %c0_4] : memref<1x1x32xf32, #tpu.memory_space<vmem>>, vector<1x1x32xf32>
    %c0_5 = arith.constant 0 : index
    %c0_6 = arith.constant 0 : index
    %2 = memref.load %arg4[%c0_5, %c0_6] : memref<1x1xf32, #tpu.memory_space<smem>>
    "tpu.trace_start"() <{level = 10 : i32, message = "nkd,nsd->nks"}> : () -> ()
    %cst = arith.constant dense<0.000000e+00> : vector<1x1x8xf32>
    %3 = tpu.matmul %1, %0, %cst {dimension_numbers = #tpu.dot_dimension_numbers<[2], [2], [1], [1], [0, 0, 0, 1, 1, 1], [0], [0]>} : vector<1x1x32xf32>, vector<1x8x32xf32>, vector<1x1x8xf32> -> vector<1x1x8xf32>
    "tpu.trace_stop"() : () -> ()
    %4 = vector.broadcast %2 : f32 to vector<1x1x8xf32>
    %5 = arith.addf %3, %4 : vector<1x1x8xf32>
    %c0_7 = arith.constant 0 : index
    %c0_8 = arith.constant 0 : index
    %c0_9 = arith.constant 0 : index
    %6 = vector.load %arg2[%c0_7, %c0_8, %c0_9] : memref<1x1x8xf32, #tpu.memory_space<vmem>>, vector<1x1x8xf32>
    %cst_10 = arith.constant 0.000000e+00 : f32
    %7 = vector.broadcast %cst_10 : f32 to vector<1x1x8xf32>
    %8 = arith.cmpf oeq, %6, %7 : vector<1x1x8xf32>
    %cst_11 = arith.constant -1.000000e+09 : f32
    %9 = vector.broadcast %cst_11 : f32 to vector<1x1x8xf32>
    %10 = arith.select %8, %9, %5 : vector<1x1x8xi1>, vector<1x1x8xf32>
    %cst_12 = arith.constant dense<0xFF800000> : vector<1x1xf32>
    %11 = vector.multi_reduction <maximumf>, %10, %cst_12 [2] : vector<1x1x8xf32> to vector<1x1xf32>
    %12 = vector.shape_cast %11 : vector<1x1xf32> to vector<1x1x1xf32>
    %13 = vector.broadcast %12 : vector<1x1x1xf32> to vector<1x1x8xf32>
    %14 = arith.subf %10, %13 : vector<1x1x8xf32>
    %15 = math.exp %14 : vector<1x1x8xf32>
    %cst_13 = arith.constant dense<0.000000e+00> : vector<1x1xf32>
    %16 = vector.multi_reduction <add>, %15, %cst_13 [2] : vector<1x1x8xf32> to vector<1x1xf32>
    %17 = vector.shape_cast %16 : vector<1x1xf32> to vector<1x1x1xf32>
    %18 = tpu.reciprocal %17 : vector<1x1x1xf32> -> vector<1x1x1xf32>
    %19 = vector.broadcast %18 : vector<1x1x1xf32> to vector<1x1x8xf32>
    %20 = arith.mulf %15, %19 : vector<1x1x8xf32>
    %c0_14 = arith.constant 0 : index
    %c0_15 = arith.constant 0 : index
    %c0_16 = arith.constant 0 : index
    %21 = vector.load %arg6[%c0_14, %c0_15, %c0_16] : memref<1x1x8xf32, #tpu.memory_space<vmem>>, vector<1x1x8xf32>
    tpu.vector_store %arg6[%c0_14, %c0_15, %c0_16], %20 {strides = array<i32>} : memref<1x1x8xf32, #tpu.memory_space<vmem>>, vector<1x1x8xf32>,
    "tpu.trace_start"() <{level = 10 : i32, message = "nks,nsh->nkh"}> : () -> ()
    %cst_17 = arith.constant dense<0.000000e+00> : vector<1x1x32xf32>
    %22 = tpu.matmul %20, %0, %cst_17 {dimension_numbers = #tpu.dot_dimension_numbers<[2], [1], [1], [2], [0, 0, 0, 1, 1, 2], [0], [0]>} : vector<1x1x8xf32>, vector<1x8x32xf32>, vector<1x1x32xf32> -> vector<1x1x32xf32>
    "tpu.trace_stop"() : () -> ()
    %c0_18 = arith.constant 0 : index
    %c0_19 = arith.constant 0 : index
    %c0_20 = arith.constant 0 : index
    %23 = vector.load %arg5[%c0_18, %c0_19, %c0_20] : memref<1x1x32xf32, #tpu.memory_space<vmem>>, vector<1x1x32xf32>
    tpu.vector_store %arg5[%c0_18, %c0_19, %c0_20], %22 {strides = array<i32>} : memref<1x1x32xf32, #tpu.memory_space<vmem>>, vector<1x1x32xf32>,
    return
  }
  func.func @transform_0(%arg0: i32) -> (i32, i32, i32) {
    %c0_i32 = arith.constant 0 : i32
    %c0_i32_0 = arith.constant 0 : i32
    %c0_i32_1 = arith.constant 0 : i32
    return %arg0, %c0_i32, %c0_i32_0 : i32, i32, i32
  }
  func.func @transform_1(%arg0: i32) -> (i32, i32, i32) {
    %c0_i32 = arith.constant 0 : i32
    %c0_i32_0 = arith.constant 0 : i32
    %c0_i32_1 = arith.constant 0 : i32
    return %arg0, %c0_i32, %c0_i32_0 : i32, i32, i32
  }
  func.func @transform_2(%arg0: i32) -> (i32, i32, i32) {
    %c0_i32 = arith.constant 0 : i32
    %c0_i32_0 = arith.constant 0 : i32
    %c0_i32_1 = arith.constant 0 : i32
    %c0_i32_2 = arith.constant 0 : i32
    return %c0_i32, %c0_i32_0, %c0_i32_1 : i32, i32, i32
  }
  func.func @transform_3(%arg0: i32) -> (i32, i32) {
    %c0_i32 = arith.constant 0 : i32
    %c0_i32_0 = arith.constant 0 : i32
    %c0_i32_1 = arith.constant 0 : i32
    return %c0_i32, %c0_i32_0 : i32, i32
  }
  func.func @transform_4(%arg0: i32) -> (i32, i32, i32) {
    %c0_i32 = arith.constant 0 : i32
    %c0_i32_0 = arith.constant 0 : i32
    %c0_i32_1 = arith.constant 0 : i32
    return %arg0, %c0_i32, %c0_i32_0 : i32, i32, i32
  }
  func.func @transform_5(%arg0: i32) -> (i32, i32, i32) {
    %c0_i32 = arith.constant 0 : i32
    %c0_i32_0 = arith.constant 0 : i32
    %c0_i32_1 = arith.constant 0 : i32
    return %arg0, %c0_i32, %c0_i32_0 : i32, i32, i32
  }
}

</mosaic_0001>

<llo_original>
// kernel: tpu_custom_call.1
$region0: #{tpu_custom_call.1}
  #allocation0 [shape = 'u32[]', space=smem, size = 0x4, offset = 0x4, fixed_abs, tag = 'smem constant byte address 0x4 - core index']
  #allocation1 [shape = 'u32[72,128]{1,0:T(1,128)}', space=vmem, size = 0x9000, scoped, tag = 'internal scratch']
  #allocation2 [shape = 'f32[1,1]{1,0:T(1,128)S(6)}', space=smem, size = 0x200, scoped, tag = 'scoped memory for tpu_custom_call.1']
  %s0 = inlined_call_operand.hbm [shape: f32[2,8,32], index: 0, kind: input, shape index: {}]
  %s1 = inlined_call_operand.vmem [shape: f32[2,1,8], index: 1, kind: input, shape index: {}]
  %s2 = inlined_call_operand.vmem [shape: f32[1,1,32], index: 2, kind: input, shape index: {}]
  %s3 = inlined_call_operand.<no memory space> [shape: f32[1,1], index: 3, kind: input, shape index: {}]
  %s4 = inlined_call_operand.hbm [shape: f32[2,1,32], index: 4, kind: output, shape index: {0}]
  %s5 = inlined_call_operand.hbm [shape: f32[2,1,8], index: 5, kind: output, shape index: {1}]
  %6 = xla_tuple %s4, %s5
  %s7 = sld [smem:[#allocation0]]
  $region61: #{tpu_custom_call.1} parent=0
    _
  %s9 = ssub.s32 1, %s7
  %s10 = scalar_select 0, %s9, %s7
  %11 = sst [smem:[#allocation2]] %s3
  $region1: #{tpu_custom_call.1} parent=0
    #allocation3 [shape = 'u8[8192]{0}', space=vmem, size = 0x2000, scoped, tag = 'input window, operand 0']
    #allocation4 [shape = 's32[2]{0}', space=sflag, size = 0x8, scoped, tag = 'scoped memory for tpu_custom_call.1']
    #allocation5 [shape = 's32[2]{0}', space=sflag, size = 0x8, scoped, tag = 'scoped memory for tpu_custom_call.1']
    #allocation6 [shape = 'u8[1024]{0}', space=vmem, size = 0x400, scoped, tag = 'output window, operand 0']
    #allocation7 [shape = 'u8[1024]{0}', space=vmem, size = 0x400, scoped, tag = 'output window, operand 1']
    #allocation8 [shape = 's32[2]{0}', space=sflag, size = 0x8, scoped, tag = 'scoped memory for tpu_custom_call.1']
    %12 = vsyncpa [#allocation4], 0
    %s13 = scalar_lea.sflag [#allocation4], 1
    %14 = vsyncpa %s13, 0
    %15 = vsyncpa [#allocation5], 0
    %s16 = scalar_lea.sflag [#allocation5], 1
    %17 = vsyncpa %s16, 0
    %18 = vsyncpa [#allocation8], 0
    %s19 = scalar_lea.sflag [#allocation8], 1
    %20 = vsyncpa %s19, 0
    loop: start=0, step=1, limit=4
    $region2: #{tpu_custom_call.1} parent=1 // loop_pre_header
      _
    $region3: #{tpu_custom_call.1} parent=1 // loop_header
      %s22 = sphi 0, %s26
      %p23 = scmp.ge.s32.totalorder %s22, 4
      %s32 = sphi 0, %s34
      %s35 = sphi 0, %s32
      %s36 = sphi 0, %s35
      %s52 = sphi 0, %s36
      %s58 = sphi 0, %s60
      %s61 = sphi 0, %s58
      %s62 = sphi 0, %s61
      %s78 = sphi 0, %s62
      %s82 = sphi 0, %s82
      %s84 = sphi 0, %s82
      %s85 = sphi 0, %s84
      %s99 = sphi 0, %s85
      %s103 = sphi 0, %s103
      %s105 = sphi 0, %s103
      %s106 = sphi 0, %s105
      %s120 = sphi 0, %s106
      %s126 = sphi 0, %s128
      %s129 = sphi 0, %s126
      %s130 = sphi 0, %s129
      %s146 = sphi 0, %s130
      %s152 = sphi 0, %s154
      %s155 = sphi 0, %s152
      %s156 = sphi 0, %s155
      %s172 = sphi 0, %s156
    $region4: #{tpu_custom_call.1} parent=1 // loop_header_branch
      %25 = sbr.rel (%p23) target = $region8
    $region5: #{tpu_custom_call.1} parent=1 // loop_body
      %s27 = ssub.s32 %s22, 1
      %s28 = ssub.s32 %s22, 2
      %s29 = sadd.s32 %s22, 1
      %s30 = ssub.s32 %s22, %s29
      %p31 = scmp.eq.s32.totalorder %s30, 0
      %s33 = sadd.s32 %s32, 1
      %s34 = scalar_select %p31, %s32, %s33
      %p37 = pneg %p31
      %p38 = scmp.eq.s32.totalorder %s22, 1
      %p39 = por %p37, %p38
      %p40 = scmp.ne.s32.totalorder %s32, %s35
      %p41 = scmp.eq.s32.totalorder %s22, 0
      %p42 = por %p40, %p41
      %p43 = scmp.ne.s32.totalorder %s32, %s35
      %p44 = scmp.eq.s32.totalorder %s27, 1
      %p45 = por %p43, %p44
      %p46 = scmp.ne.s32.totalorder %s35, %s36
      %p47 = scmp.eq.s32.totalorder %s27, 0
      %p48 = por %p46, %p47
      %p49 = scmp.ne.s32.totalorder %s35, %s36
      %p50 = scmp.eq.s32.totalorder %s28, 1
      %p51 = por %p49, %p50
      %p53 = scmp.ne.s32.totalorder %s36, %s52
      %p54 = scmp.eq.s32.totalorder %s28, 0
      %p55 = por %p53, %p54
      %s56 = ssub.s32 %s22, %s29
      %p57 = scmp.eq.s32.totalorder %s56, 0
      %s59 = sadd.s32 %s58, 1
      %s60 = scalar_select %p57, %s58, %s59
      %p63 = pneg %p57
      %p64 = scmp.eq.s32.totalorder %s22, 1
      %p65 = por %p63, %p64
      %p66 = scmp.ne.s32.totalorder %s58, %s61
      %p67 = scmp.eq.s32.totalorder %s22, 0
      %p68 = por %p66, %p67
      %p69 = scmp.ne.s32.totalorder %s58, %s61
      %p70 = scmp.eq.s32.totalorder %s27, 1
      %p71 = por %p69, %p70
      %p72 = scmp.ne.s32.totalorder %s61, %s62
      %p73 = scmp.eq.s32.totalorder %s27, 0
      %p74 = por %p72, %p73
      %p75 = scmp.ne.s32.totalorder %s61, %s62
      %p76 = scmp.eq.s32.totalorder %s28, 1
      %p77 = por %p75, %p76
      %p79 = scmp.ne.s32.totalorder %s62, %s78
      %p80 = scmp.eq.s32.totalorder %s28, 0
      %p81 = por %p79, %p80
      %s83 = sadd.s32 %s82, 1
      %p86 = scmp.eq.s32.totalorder %s22, 1
      %p87 = scmp.ne.s32.totalorder %s82, %s84
      %p88 = scmp.eq.s32.totalorder %s22, 0
      %p89 = por %p87, %p88
      %p90 = scmp.ne.s32.totalorder %s82, %s84
      %p91 = scmp.eq.s32.totalorder %s27, 1
      %p92 = por %p90, %p91
      %p93 = scmp.ne.s32.totalorder %s84, %s85
      %p94 = scmp.eq.s32.totalorder %s27, 0
      %p95 = por %p93, %p94
      %p96 = scmp.ne.s32.totalorder %s84, %s85
      %p97 = scmp.eq.s32.totalorder %s28, 1
      %p98 = por %p96, %p97
      %p100 = scmp.ne.s32.totalorder %s85, %s99
      %p101 = scmp.eq.s32.totalorder %s28, 0
      %p102 = por %p100, %p101
      %s104 = sadd.s32 %s103, 1
      %p107 = scmp.eq.s32.totalorder %s22, 1
      %p108 = scmp.ne.s32.totalorder %s103, %s105
      %p109 = scmp.eq.s32.totalorder %s22, 0
      %p110 = por %p108, %p109
      %p111 = scmp.ne.s32.totalorder %s103, %s105
      %p112 = scmp.eq.s32.totalorder %s27, 1
      %p113 = por %p111, %p112
      %p114 = scmp.ne.s32.totalorder %s105, %s106
      %p115 = scmp.eq.s32.totalorder %s27, 0
      %p116 = por %p114, %p115
      %p117 = scmp.ne.s32.totalorder %s105, %s106
      %p118 = scmp.eq.s32.totalorder %s28, 1
      %p119 = por %p117, %p118
      %p121 = scmp.ne.s32.totalorder %s106, %s120
      %p122 = scmp.eq.s32.totalorder %s28, 0
      %p123 = por %p121, %p122
      %s124 = ssub.s32 %s22, %s29
      %p125 = scmp.eq.s32.totalorder %s124, 0
      %s127 = sadd.s32 %s126, 1
      %s128 = scalar_select %p125, %s126, %s127
      %p131 = pneg %p125
      %p132 = scmp.eq.s32.totalorder %s22, 1
      %p133 = por %p131, %p132
      %p134 = scmp.ne.s32.totalorder %s126, %s129
      %p135 = scmp.eq.s32.totalorder %s22, 0
      %p136 = por %p134, %p135
      %p137 = scmp.ne.s32.totalorder %s126, %s129
      %p138 = scmp.eq.s32.totalorder %s27, 1
      %p139 = por %p137, %p138
      %p140 = scmp.ne.s32.totalorder %s129, %s130
      %p141 = scmp.eq.s32.totalorder %s27, 0
      %p142 = por %p140, %p141
      %p143 = scmp.ne.s32.totalorder %s129, %s130
      %p144 = scmp.eq.s32.totalorder %s28, 1
      %p145 = por %p143, %p144
      %p147 = scmp.ne.s32.totalorder %s130, %s146
      %p148 = scmp.eq.s32.totalorder %s28, 0
      %p149 = por %p147, %p148
      %s150 = ssub.s32 %s22, %s29
      %p151 = scmp.eq.s32.totalorder %s150, 0
      %s153 = sadd.s32 %s152, 1
      %s154 = scalar_select %p151, %s152, %s153
      %p157 = pneg %p151
      %p158 = scmp.eq.s32.totalorder %s22, 1
      %p159 = por %p157, %p158
      %p160 = scmp.ne.s32.totalorder %s152, %s155
      %p161 = scmp.eq.s32.totalorder %s22, 0
      %p162 = por %p160, %p161
      %p163 = scmp.ne.s32.totalorder %s152, %s155
      %p164 = scmp.eq.s32.totalorder %s27, 1
      %p165 = por %p163, %p164
      %p166 = scmp.ne.s32.totalorder %s155, %s156
      %p167 = scmp.eq.s32.totalorder %s27, 0
      %p168 = por %p166, %p167
      %p169 = scmp.ne.s32.totalorder %s155, %s156
      %p170 = scmp.eq.s32.totalorder %s28, 1
      %p171 = por %p169, %p170
      %p173 = scmp.ne.s32.totalorder %s156, %s172
      %p174 = scmp.eq.s32.totalorder %s28, 0
      %p175 = por %p173, %p174
      %p176 = scmp.le.s32.totalorder 1, %s22
      %p177 = scmp.lt.s32.totalorder %s22, 3
      %p178 = pnand %p176, %p177
      %p179 = pneg %p178
      // Predicated region
      $region9: #{tpu_custom_call.1} parent=5 // pred_check
        _
      $region10: #{tpu_custom_call.1} parent=5 // pred_check_branch
        %181 = sbr.rel (%p178) target = $region12
      $region11: #{tpu_custom_call.1} parent=5 // pred_region
        %s182 = ssub.s32 %s22, 1
        // Predicated region
        $region13: #{tpu_custom_call.1} parent=11 // pred_check
          %p183 = pneg %p95
        $region14: #{tpu_custom_call.1} parent=11 // pred_check_branch
          %185 = sbr.rel (%p183) target = $region16
        $region15: #{tpu_custom_call.1} parent=11 // pred_region
          _
        $region16: #{tpu_custom_call.1} parent=11 // pred_fallthru
          _
        // Predicated region
        $region17: #{tpu_custom_call.1} parent=11 // pred_check
          %p186 = pneg %p116
        $region18: #{tpu_custom_call.1} parent=11 // pred_check_branch
          %188 = sbr.rel (%p186) target = $region20
        $region19: #{tpu_custom_call.1} parent=11 // pred_region
          _
        $region20: #{tpu_custom_call.1} parent=11 // pred_fallthru
          _
      $region12: #{tpu_custom_call.1} parent=5 // pred_fallthru
        _
      %p189 = scmp.lt.s32.totalorder %s22, 2
      // Predicated region
      $region21: #{tpu_custom_call.1} parent=5 // pred_check
        %p190 = pneg %p189
      $region22: #{tpu_custom_call.1} parent=5 // pred_check_branch
        %192 = sbr.rel (%p190) target = $region24
      $region23: #{tpu_custom_call.1} parent=5 // pred_region
        // Predicated region
        $region25: #{tpu_custom_call.1} parent=23 // pred_check
          %p193 = pneg %p42
        $region26: #{tpu_custom_call.1} parent=23 // pred_check_branch
          %195 = sbr.rel (%p193) target = $region28
        $region27: #{tpu_custom_call.1} parent=23 // pred_region
          %s196 = sand.u32 %s32, 1
          %s197 = scalar_lea.sflag [#allocation4], %s196
          %s198 = sand.u32 %s32, 1
          %s199 = smul.addr %s198, 8
          %s200 = scalar_lea.vmem [#allocation3], %s199
          %202 = vsyncadd %s197, 0
          %s203 = smul.addr %s22, 8
          %s204 = scalar_lea.hbm %s0, %s203
          %s206 = sshll.u32 %s204, 4
          %s207 = int_to_ptr.hbm [resolvable:$true] %s206
          %s208 = sshll.u32 %s200, 4
          %s209 = int_to_ptr.vmem [resolvable:$true] %s208
          %211 = dma.hbm_to_vmem [thread:$0]  %s207, 128, %s209, %s197
        $region28: #{tpu_custom_call.1} parent=23 // pred_fallthru
          _
        // Predicated region
        $region29: #{tpu_custom_call.1} parent=23 // pred_check
          %p212 = pneg %p68
        $region30: #{tpu_custom_call.1} parent=23 // pred_check_branch
          %214 = sbr.rel (%p212) target = $region32
        $region31: #{tpu_custom_call.1} parent=23 // pred_region
          %p215 = scmp.lt.s32.totalorder %s22, 1
          %s216 = scalar_select %p215, %s22, 1
          %s217 = scalar_lea.vmem %s1, %s216
        $region32: #{tpu_custom_call.1} parent=23 // pred_fallthru
          _
      $region24: #{tpu_custom_call.1} parent=5 // pred_fallthru
        _
      %p218 = scmp.le.s32.totalorder 1, %s22
      %p219 = scmp.lt.s32.totalorder %s22, 3
      %p220 = pnand %p218, %p219
      %p221 = pneg %p220
      // Predicated region
      $region33: #{tpu_custom_call.1} parent=5 // pred_check
        _
      $region34: #{tpu_custom_call.1} parent=5 // pred_check_branch
        %223 = sbr.rel (%p220) target = $region36
      $region35: #{tpu_custom_call.1} parent=5 // pred_region
        %s224 = ssub.s32 %s22, 1
        %s225 = sand.u32 %s35, 1
        %s226 = scalar_lea.sflag [#allocation4], %s225
        %s227 = sand.u32 %s35, 1
        %s228 = smul.addr %s227, 8
        %s229 = scalar_lea.vmem [#allocation3], %s228
        // Predicated region
        $region37: #{tpu_custom_call.1} parent=35 // pred_check
          %p230 = pneg %p48
        $region38: #{tpu_custom_call.1} parent=35 // pred_check_branch
          %232 = sbr.rel (%p230) target = $region40
        $region39: #{tpu_custom_call.1} parent=35 // pred_region
          %234 = dma.done %s226, 128
        $region40: #{tpu_custom_call.1} parent=35 // pred_fallthru
          _
        %s235 = sand.u32 %s35, 1
        %s236 = scalar_lea.sflag [#allocation4], %s235
        %s237 = sand.u32 %s35, 1
        %s238 = smul.addr %s237, 8
        %s239 = scalar_lea.vmem [#allocation3], %s238
        %p240 = pneg %p48
        %p241 = pneg %p45
        %p242 = scmp.lt.s32.totalorder %s27, 1
        %s243 = scalar_select %p242, %s27, 1
        %s244 = scalar_lea.vmem %s1, %s243
        %p245 = pneg %p74
        %p246 = pneg %p71
        %p247 = pneg %p95
        %p248 = pneg %p92
        %p249 = pneg %p116
        %p250 = pneg %p113
        %p251 = pneg %p142
        %p252 = pneg %p139
        %s253 = sand.u32 %s129, 1
        %s254 = scalar_lea.sflag [#allocation5], %s253
        %s255 = sand.u32 %s129, 1
        %s256 = scalar_lea.vmem [#allocation6], %s255
        %p257 = pneg %p168
        %p258 = pneg %p165
        %s259 = sand.u32 %s155, 1
        %s260 = scalar_lea.sflag [#allocation8], %s259
        %s261 = sand.u32 %s155, 1
        %s262 = scalar_lea.vmem [#allocation7], %s261
        %p263 = scmp.lt.s32.totalorder %s27, 1
        %s264 = scalar_select %p263, %s27, 1
        %s265 = scalar_lea.vmem %s1, %s264
        %v266 = vld [vmem:[%s229] sm:$0xff]
        %v267 = vld [vmem:[%s2] sm:$0x1]
        %s268 = sld [smem:[#allocation2]]
        %v269 = vstv %s268
        %vm270 = vcmask 261120
        %v272 = vsel %vm270, %v267, 0
        %v275 = vsel %vm270, %v266, 0
        %277 = vmatpush.xpose.msra.mxu0 0.0
        %278 = vmatpush.xpose.msra.mxu0 0.0
        %279 = vmatpush.xpose.msra.mxu0 0.0
        %280 = vmatpush.xpose.msra.mxu0 0.0
        %281 = vmatpush.xpose.msra.mxu0 0.0
        %282 = vmatpush.xpose.msra.mxu0 0.0
        %283 = vmatpush.xpose.msra.mxu0 0.0
        %284 = vmatpush.xpose.msra.mxu0 0.0
        %285 = vmatpush.xpose.msra.mxu0 0.0
        %286 = vmatpush.xpose.msra.mxu0 0.0
        %287 = vmatpush.xpose.msra.mxu0 0.0
        %288 = vmatpush.xpose.msra.mxu0 0.0
        %289 = vmatpush.xpose.msra.mxu0 0.0
        %290 = vmatpush.xpose.msra.mxu0 0.0
        %291 = vmatpush.xpose.msra.mxu0 0.0
        %292 = vmatpush.xpose.msra.mxu0 %v275
        %293 = vmatmul.f32.gmra.mxu0 %v272
        %v294 = vpop.f32.mrf.mxu0
        %v295 = vadd.f32 %v269, %v294
        %296 = vdwg.mxu0
        %v297 = vld [vmem:[%s265] sm:$0x1]
        %vm298 = vcmp.eq.f32.partialorder %v297, 0.0
        %v299 = vsel %vm298, -1e+09, %v295
        %vm300 = vcmask 57344
        %v301 = vsel %vm300, %v299, -inf
        %302 = vmax.xlane.f32.xlu0 %v301
        %v303 = vpop.xlane.xlu0 %302
        %v304 = vsub.f32 %v299, %v303
        %v305 = vmul.f32 %v304, 1.442695
        %v306 = vpow.pop %v305
        %v307 = vsel %vm300, %v306, 0.0
        %308 = vadd.xlane.f32.xlu0 %v307
        %v309 = vpop.xlane.xlu0 %308
        %v310 = vrcp.pop %v309
        %v311 = vmul.f32 %v309, %v310
        %v312 = vsub.f32 1.0, %v311
        %v313 = vmul.f32 %v310, %v312
        %v314 = vadd.f32 %v310, %v313
        %vm315 = vweird.f32 %v309
        %vm316 = vweird.f32 %v310
        %vm317 = vmor %vm315, %vm316
        %v318 = vsel %vm317, %v310, %v314
        %v319 = vand.u32 2147483647, %v309
        %vm320 = vcmp.eq.f32.partialorder %v319, 8.507059e+37
        %v321 = vand.u32 %v309, 2147483648
        %v322 = vor.u32 1.1754944e-38, %v321
        %v323 = vsel %vm320, %v322, %v318
        %v324 = vmul.f32 %v306, %v323
        %325 = vst.msk [vmem:[%s262] sm:$0x1] %vm300, %v324
        %vm326 = vcmask 64512
        %v328 = vsel %vm326, %v324, 0
        %330 = vmatpush.msra.mxu0 0.0
        %331 = vmatpush.msra.mxu0 0.0
        %332 = vmatpush.msra.mxu0 0.0
        %333 = vmatpush.msra.mxu0 0.0
        %334 = vmatpush.msra.mxu0 0.0
        %335 = vmatpush.msra.mxu0 0.0
        %336 = vmatpush.msra.mxu0 0.0
        %337 = vmatpush.msra.mxu0 0.0
        %338 = vmatpush.msra.mxu0 0.0
        %339 = vmatpush.msra.mxu0 0.0
        %340 = vmatpush.msra.mxu0 0.0
        %341 = vmatpush.msra.mxu0 0.0
        %342 = vmatpush.msra.mxu0 0.0
        %343 = vmatpush.msra.mxu0 0.0
        %344 = vmatpush.msra.mxu0 0.0
        %345 = vmatpush.msra.mxu0 %v266
        %346 = vmatmul.f32.gmra.mxu0 %v328
        %v347 = vpop.f32.mrf.mxu0
        %v348 = vadd.f32 0.0, %v347
        %349 = vdwg.mxu0
        %vm350 = vcmask 253952
        %351 = vst.msk [vmem:[%s256] sm:$0x1] %vm350, %v348
        %s352 = sand.u32 %s129, 1
        %s353 = scalar_lea.sflag [#allocation5], %s352
        %s354 = sand.u32 %s129, 1
        %s355 = scalar_lea.vmem [#allocation6], %s354
        %s356 = sand.u32 %s155, 1
        %s357 = scalar_lea.sflag [#allocation8], %s356
        %s358 = sand.u32 %s155, 1
        %s359 = scalar_lea.vmem [#allocation7], %s358
        // Predicated region
        $region41: #{tpu_custom_call.1} parent=35 // pred_check
          %p360 = pneg %p139
        $region42: #{tpu_custom_call.1} parent=35 // pred_check_branch
          %362 = sbr.rel (%p360) target = $region44
        $region43: #{tpu_custom_call.1} parent=35 // pred_region
          %364 = vsyncadd %s353, 0
          %s365 = scalar_lea.hbm %s4, %s27
          %s367 = sshll.u32 %s355, 4
          %s368 = int_to_ptr.vmem [resolvable:$true] %s367
          %s369 = sshll.u32 %s365, 4
          %s370 = int_to_ptr.hbm [resolvable:$true] %s369
          %372 = dma.vmem_to_hbm [thread:$0]  %s368, 16, %s370, %s353
        $region44: #{tpu_custom_call.1} parent=35 // pred_fallthru
          _
        // Predicated region
        $region45: #{tpu_custom_call.1} parent=35 // pred_check
          %p373 = pneg %p165
        $region46: #{tpu_custom_call.1} parent=35 // pred_check_branch
          %375 = sbr.rel (%p373) target = $region48
        $region47: #{tpu_custom_call.1} parent=35 // pred_region
          %377 = vsyncadd %s357, 0
          %s378 = scalar_lea.hbm %s5, %s27
          %s380 = sshll.u32 %s359, 4
          %s381 = int_to_ptr.vmem [resolvable:$true] %s380
          %s382 = sshll.u32 %s378, 4
          %s383 = int_to_ptr.hbm [resolvable:$true] %s382
          %385 = dma.vmem_to_hbm [thread:$0]  %s381, 16, %s383, %s357
        $region48: #{tpu_custom_call.1} parent=35 // pred_fallthru
          _
      $region36: #{tpu_custom_call.1} parent=5 // pred_fallthru
        _
      %p386 = scmp.le.s32.totalorder 2, %s22
      // Predicated region
      $region49: #{tpu_custom_call.1} parent=5 // pred_check
        %p387 = pneg %p386
      $region50: #{tpu_custom_call.1} parent=5 // pred_check_branch
        %389 = sbr.rel (%p387) target = $region52
      $region51: #{tpu_custom_call.1} parent=5 // pred_region
        %s390 = ssub.s32 %s22, 2
        // Predicated region
        $region53: #{tpu_custom_call.1} parent=51 // pred_check
          %p391 = pneg %p145
        $region54: #{tpu_custom_call.1} parent=51 // pred_check_branch
          %393 = sbr.rel (%p391) target = $region56
        $region55: #{tpu_custom_call.1} parent=51 // pred_region
          %s394 = sand.u32 %s130, 1
          %s395 = scalar_lea.sflag [#allocation5], %s394
          %s396 = sand.u32 %s130, 1
          %s397 = scalar_lea.vmem [#allocation6], %s396
          %399 = dma.done %s395, 16
        $region56: #{tpu_custom_call.1} parent=51 // pred_fallthru
          _
        // Predicated region
        $region57: #{tpu_custom_call.1} parent=51 // pred_check
          %p400 = pneg %p171
        $region58: #{tpu_custom_call.1} parent=51 // pred_check_branch
          %402 = sbr.rel (%p400) target = $region60
        $region59: #{tpu_custom_call.1} parent=51 // pred_region
          %s403 = sand.u32 %s156, 1
          %s404 = scalar_lea.sflag [#allocation8], %s403
          %s405 = sand.u32 %s156, 1
          %s406 = scalar_lea.vmem [#allocation7], %s405
          %408 = dma.done %s404, 16
        $region60: #{tpu_custom_call.1} parent=51 // pred_fallthru
          _
      $region52: #{tpu_custom_call.1} parent=5 // pred_fallthru
        _
    $region6: #{tpu_custom_call.1} parent=1 // loop_footer
      %s26 = sadd.s32 1, %s22
    $region7: #{tpu_custom_call.1} parent=1 // loop_footer_branch
      %21 = sbr.rel target = $region3
    $region8: #{tpu_custom_call.1} parent=1 // loop_exit
      _
    %409 = vsyncpa [#allocation4], 1
    %s410 = scalar_lea.sflag [#allocation4], 1
    %411 = vsyncpa %s410, 1
    %412 = vsyncpa [#allocation5], 1
    %s413 = scalar_lea.sflag [#allocation5], 1
    %414 = vsyncpa %s413, 1
    %415 = vsyncpa [#allocation8], 1
    %s416 = scalar_lea.sflag [#allocation8], 1
    %417 = vsyncpa %s416, 1

</llo_original>
